<compile_context>
chip_gen: v7x
topology: tpu7x:2x2x1
jax: 0.10.0
libtpu: 0.0.40
codegen_flags: <defaults>
</compile_context>

<pallas_src>
import jax
import jax.numpy as jnp
from jax.experimental import pallas as pl
from jax.experimental.pallas import tpu as pltpu

PI = 3.141592653589793

_LANE_CHOICES = (1024, 512, 256, 128)   # lane-dense last-dim candidates
_MAX_BLOCK_BYTES = 4 << 20              # 4 MiB per input block
_VMEM_LIMIT_BYTES = 48 << 20            # 4 arrays x 2 bufs x 4 MiB = 32 MiB + headroom


def _cone_negation_kernel(axis_ref, arg_ref, axis_out_ref, arg_out_ref):
    axis = axis_ref[...]
    # Pure VPU elementwise; jnp.where keeps torch's `>= 0` handling of -0.0.
    axis_out_ref[...] = jnp.where(axis >= 0, axis - PI, axis + PI)
    arg_out_ref[...] = PI - arg_ref[...]


def _cone_negation_jnp(axis_embedding, arg_embedding):
    axis_out = jnp.where(axis_embedding >= 0,
                         axis_embedding - PI, axis_embedding + PI)
    return axis_out, PI - arg_embedding


def cone_negation(axis_embedding: jax.Array, arg_embedding: jax.Array,
                  *, min_pallas_elems: int = 1 << 20):
    """ConeNegation forward. axis/arg embeddings must share shape & dtype."""
    assert axis_embedding.shape == arg_embedding.shape
    assert axis_embedding.dtype == arg_embedding.dtype

    shape = axis_embedding.shape
    dtype = axis_embedding.dtype
    itemsize = jnp.dtype(dtype).itemsize
    n = int(axis_embedding.size)

    # Largest lane width that divides n -> reshape is zero-copy.
    lane_w = next((w for w in _LANE_CHOICES if n % w == 0), None)

    # Fallback: tiny tensors (dispatch-dominated) or sizes that would require
    # a padded HBM copy to become lane-dense.  XLA fuses this 5-op stream to
    # the same roofline with no extra copies.
    if n < min_pallas_elems or lane_w is None:
        return _cone_negation_jnp(axis_embedding, arg_embedding)

    rows = n // lane_w
    # Dtype-aware sublane multiple: 8 (f32) / 16 (bf16/f16) / 32 (int8/fp8).
    sub = 8 * (4 // itemsize)

    # Zero-copy layout plumbing: contiguous reshape to (rows, lane_w).
    axis_2d = axis_embedding.reshape(rows, lane_w)
    arg_2d = arg_embedding.reshape(rows, lane_w)

    slab_bytes = rows * lane_w * itemsize
    if slab_bytes <= _MAX_BLOCK_BYTES:
        # Whole slab in one block; block dims == full array dims, so no
        # (8,128) divisibility requirement applies.
        block_rows = rows
    else:
        block_rows = max(
            sub, (_MAX_BLOCK_BYTES // (lane_w * itemsize)) // sub * sub)
    grid = (pl.cdiv(rows, block_rows),)   # Pallas masks the ragged last block

    blk = pl.BlockSpec((block_rows, lane_w), lambda i: (i, 0))
    out_sds = jax.ShapeDtypeStruct((rows, lane_w), dtype)

    axis_out_2d, arg_out_2d = pl.pallas_call(
        _cone_negation_kernel,
        out_shape=(out_sds, out_sds),
        grid=grid,
        in_specs=[blk, blk],
        out_specs=(blk, blk),
        # In-place semantics of the original module: reuse input buffers.
        input_output_aliases={0: 0, 1: 1},
        compiler_params=pltpu.CompilerParams(
            dimension_semantics=("parallel",),
            vmem_limit_bytes=_VMEM_LIMIT_BYTES),
        cost_estimate=pl.CostEstimate(
            flops=3 * n, transcendentals=0,
            bytes_accessed=4 * n * itemsize),
    )(axis_2d, arg_2d)

    return axis_out_2d.reshape(shape), arg_out_2d.reshape(shape)


if __name__ == "__main__":
    key = jax.random.PRNGKey(0)
    k_axis, k_arg = jax.random.split(key)

    batch, num_ents, dim = 2, 8, 32
    axis_embedding = jax.random.uniform(
        k_axis, (batch, num_ents, dim), dtype=jnp.float32, minval=-PI, maxval=PI
    )
    arg_embedding = jax.random.uniform(
        k_arg, (batch, num_ents, dim), dtype=jnp.float32, minval=0.0, maxval=PI
    )

    # Reference computed before the call (inputs may be aliased by outputs).
    axis_ref = jnp.where(axis_embedding >= 0,
                         axis_embedding - PI, axis_embedding + PI)
    arg_ref = PI - arg_embedding
    jax.block_until_ready((axis_ref, arg_ref))

    # Force the Pallas path even at this tiny test shape (production callers
    # with small tensors take the fused-XLA fallback automatically).
    axis_out, arg_out = cone_negation(
        axis_embedding, arg_embedding, min_pallas_elems=0
    )
    jax.block_until_ready((axis_out, arg_out))

    assert axis_out.shape == axis_embedding.shape
    assert arg_out.shape == arg_embedding.shape
    assert jnp.allclose(axis_out, axis_ref, atol=1e-6)
    assert jnp.allclose(arg_out, arg_ref, atol=1e-6)

    print("KERNEL_OK")
</pallas_src>

<mosaic_0001>
module attributes {stable_mosaic.version = 11 : i64} {
  func.func @_cone_negation_kernel(%arg0: i32, %arg1: memref<1x512xf32, #tpu.memory_space<vmem>>, %arg2: memref<1x512xf32, #tpu.memory_space<vmem>>, %arg3: memref<1x512xf32, #tpu.memory_space<vmem>>, %arg4: memref<1x512xf32, #tpu.memory_space<vmem>>) attributes {dimension_semantics = [#tpu.dimension_semantics<parallel>], iteration_bounds = array<i64: 1>, scalar_prefetch = 0 : i64, scratch_operands = 0 : i64, tpu.core_type = #tpu.core_type<tc>, window_params = [{transform_indices = @transform_0, window_bounds = array<i64: 1, 512>}, {transform_indices = @transform_1, window_bounds = array<i64: 1, 512>}, {transform_indices = @transform_2, window_bounds = array<i64: 1, 512>}, {transform_indices = @transform_3, window_bounds = array<i64: 1, 512>}]} {
    %c0 = arith.constant 0 : index
    %c0_0 = arith.constant 0 : index
    %0 = vector.load %arg1[%c0, %c0_0] : memref<1x512xf32, #tpu.memory_space<vmem>>, vector<1x512xf32>
    %cst = arith.constant 0.000000e+00 : f32
    %1 = vector.broadcast %cst : f32 to vector<1x512xf32>
    %2 = arith.cmpf oge, %0, %1 : vector<1x512xf32>
    %cst_1 = arith.constant 3.14159274 : f32
    %3 = vector.broadcast %cst_1 : f32 to vector<1x512xf32>
    %4 = arith.subf %0, %3 : vector<1x512xf32>
    %cst_2 = arith.constant 3.14159274 : f32
    %5 = vector.broadcast %cst_2 : f32 to vector<1x512xf32>
    %6 = arith.addf %0, %5 : vector<1x512xf32>
    %7 = arith.select %2, %4, %6 : vector<1x512xi1>, vector<1x512xf32>
    %c0_3 = arith.constant 0 : index
    %c0_4 = arith.constant 0 : index
    %8 = vector.load %arg3[%c0_3, %c0_4] : memref<1x512xf32, #tpu.memory_space<vmem>>, vector<1x512xf32>
    tpu.vector_store %arg3[%c0_3, %c0_4], %7 {strides = array<i32>} : memref<1x512xf32, #tpu.memory_space<vmem>>, vector<1x512xf32>,
    %c0_5 = arith.constant 0 : index
    %c0_6 = arith.constant 0 : index
    %9 = vector.load %arg2[%c0_5, %c0_6] : memref<1x512xf32, #tpu.memory_space<vmem>>, vector<1x512xf32>
    %cst_7 = arith.constant 3.14159274 : f32
    %10 = vector.broadcast %cst_7 : f32 to vector<1x512xf32>
    %11 = arith.subf %10, %9 : vector<1x512xf32>
    %c0_8 = arith.constant 0 : index
    %c0_9 = arith.constant 0 : index
    %12 = vector.load %arg4[%c0_8, %c0_9] : memref<1x512xf32, #tpu.memory_space<vmem>>, vector<1x512xf32>
    tpu.vector_store %arg4[%c0_8, %c0_9], %11 {strides = array<i32>} : memref<1x512xf32, #tpu.memory_space<vmem>>, vector<1x512xf32>,
    return
  }
  func.func @transform_0(%arg0: i32) -> (i32, i32) {
    %c0_i32 = arith.constant 0 : i32
    %c0_i32_0 = arith.constant 0 : i32
    return %arg0, %c0_i32 : i32, i32
  }
  func.func @transform_1(%arg0: i32) -> (i32, i32) {
    %c0_i32 = arith.constant 0 : i32
    %c0_i32_0 = arith.constant 0 : i32
    return %arg0, %c0_i32 : i32, i32
  }
  func.func @transform_2(%arg0: i32) -> (i32, i32) {
    %c0_i32 = arith.constant 0 : i32
    %c0_i32_0 = arith.constant 0 : i32
    return %arg0, %c0_i32 : i32, i32
  }
  func.func @transform_3(%arg0: i32) -> (i32, i32) {
    %c0_i32 = arith.constant 0 : i32
    %c0_i32_0 = arith.constant 0 : i32
    return %arg0, %c0_i32 : i32, i32
  }
}

</mosaic_0001>

<llo_original>
// kernel: tpu_custom_call.1
$region0: #{tpu_custom_call.1}
  #allocation0 [shape = 'u32[]', space=smem, size = 0x4, offset = 0x4, fixed_abs, tag = 'smem constant byte address 0x4 - core index']
  #allocation1 [shape = 'u32[144,128]{1,0:T(1,128)}', space=vmem, size = 0x12000, scoped, tag = 'internal scratch']
  %s0 = inlined_call_operand.hbm [shape: f32[1,512], index: 0, kind: input, shape index: {}, may-alias: {0,2}]
  %s1 = inlined_call_operand.hbm [shape: f32[1,512], index: 1, kind: input, shape index: {}, may-alias: {1,3}]
  %s2 = inlined_call_operand.hbm [shape: f32[1,512], index: 2, kind: output, shape index: {0}, may-alias: {0,2}]
  %s3 = inlined_call_operand.hbm [shape: f32[1,512], index: 3, kind: output, shape index: {1}, may-alias: {1,3}]
  %4 = xla_tuple %s2, %s3
  %s5 = sld [smem:[#allocation0]]
  $region34: #{tpu_custom_call.1} parent=0
    _
  %s7 = ssub.s32 1, %s5
  %s8 = scalar_select 0, %s7, %s5
  $region1: #{tpu_custom_call.1} parent=0
    #allocation2 [shape = 'u8[2048]{0}', space=vmem, size = 0x800, scoped, tag = 'input window, operand 0, single buffered']
    #allocation3 [shape = 's32[1]{0}', space=sflag, size = 0x4, scoped, tag = 'scoped memory for tpu_custom_call.1']
    #allocation4 [shape = 's32[1]{0}', space=sflag, size = 0x4, scoped, tag = 'scoped memory for tpu_custom_call.1']
    #allocation5 [shape = 'u8[2048]{0}', space=vmem, size = 0x800, scoped, tag = 'input window, operand 1, single buffered']
    #allocation6 [shape = 's32[1]{0}', space=sflag, size = 0x4, scoped, tag = 'scoped memory for tpu_custom_call.1']
    #allocation7 [shape = 'u8[2048]{0}', space=vmem, size = 0x800, scoped, tag = 'output window, operand 0, single buffered']
    #allocation8 [shape = 'u8[2048]{0}', space=vmem, size = 0x800, scoped, tag = 'output window, operand 1, single buffered']
    #allocation9 [shape = 's32[1]{0}', space=sflag, size = 0x4, scoped, tag = 'scoped memory for tpu_custom_call.1']
    %9 = vsyncpa [#allocation3], 0
    %10 = vsyncpa [#allocation6], 0
    %11 = vsyncpa [#allocation4], 0
    %12 = vsyncpa [#allocation9], 0
    // Predicated region
    $region2: #{tpu_custom_call.1} parent=1 // pred_check
      _
    $region3: #{tpu_custom_call.1} parent=1 // pred_check_branch
      %14 = sbr.rel (0) target = $region5
    $region4: #{tpu_custom_call.1} parent=1 // pred_region
      %s16 = ssub.s32 64, 64
      %17 = vsyncadd [#allocation3], %s16
      %s19 = sshll.u32 [#allocation2], 4
      %s20 = int_to_ptr.vmem [resolvable:$true] %s19
      %22 = dma.hbm_to_vmem [thread:$0]  %s0, 64, %s20, [#allocation3]
    $region5: #{tpu_custom_call.1} parent=1 // pred_fallthru
      _
    // Predicated region
    $region6: #{tpu_custom_call.1} parent=1 // pred_check
      _
    $region7: #{tpu_custom_call.1} parent=1 // pred_check_branch
      %24 = sbr.rel (0) target = $region9
    $region8: #{tpu_custom_call.1} parent=1 // pred_region
      %s26 = ssub.s32 64, 64
      %27 = vsyncadd [#allocation6], %s26
      %s29 = sshll.u32 [#allocation5], 4
      %s30 = int_to_ptr.vmem [resolvable:$true] %s29
      %32 = dma.hbm_to_vmem [thread:$0]  %s1, 64, %s30, [#allocation6]
    $region9: #{tpu_custom_call.1} parent=1 // pred_fallthru
      _
    // Predicated region
    $region10: #{tpu_custom_call.1} parent=1 // pred_check
      _
    $region11: #{tpu_custom_call.1} parent=1 // pred_check_branch
      %34 = sbr.rel (0) target = $region13
    $region12: #{tpu_custom_call.1} parent=1 // pred_region
      %35 = dma.done [#allocation3], 64
    $region13: #{tpu_custom_call.1} parent=1 // pred_fallthru
      _
    // Predicated region
    $region14: #{tpu_custom_call.1} parent=1 // pred_check
      _
    $region15: #{tpu_custom_call.1} parent=1 // pred_check_branch
      %37 = sbr.rel (0) target = $region17
    $region16: #{tpu_custom_call.1} parent=1 // pred_region
      %38 = dma.done [#allocation6], 64
    $region17: #{tpu_custom_call.1} parent=1 // pred_fallthru
      _
    %v39 = vld [vmem:[#allocation2] sm:$0xf]
    %vm40 = vcmp.ge.f32.partialorder %v39, 0.0
    %v41 = vsub.f32 %v39, 3.1415927
    %v42 = vadd.f32 %v39, 3.1415927
    %v43 = vsel %vm40, %v41, %v42
    %v44 = vlaneseq
    %vm45 = vcmp.ge.s32.totalorder %v44, 0
    %vm46 = vcmp.lt.s32.totalorder %v44, 512
    %vm47 = vmand %vm45, %vm46
    %48 = vst.msk [vmem:[#allocation7] sm:$0xf] %vm47, %v43
    %v49 = vld [vmem:[#allocation5] sm:$0xf]
    %v50 = vsub.f32 3.1415927, %v49
    %51 = vst.msk [vmem:[#allocation8] sm:$0xf] %vm47, %v50
    // Predicated region
    $region18: #{tpu_custom_call.1} parent=1 // pred_check
      _
    $region19: #{tpu_custom_call.1} parent=1 // pred_check_branch
      %53 = sbr.rel (0) target = $region21
    $region20: #{tpu_custom_call.1} parent=1 // pred_region
      %s55 = ssub.s32 64, 64
      %56 = vsyncadd [#allocation4], %s55
      %s58 = sshll.u32 [#allocation7], 4
      %s59 = int_to_ptr.vmem [resolvable:$true] %s58
      %61 = dma.vmem_to_hbm [thread:$0]  %s59, 64, %s2, [#allocation4]
    $region21: #{tpu_custom_call.1} parent=1 // pred_fallthru
      _
    // Predicated region
    $region22: #{tpu_custom_call.1} parent=1 // pred_check
      _
    $region23: #{tpu_custom_call.1} parent=1 // pred_check_branch
      %63 = sbr.rel (0) target = $region25
    $region24: #{tpu_custom_call.1} parent=1 // pred_region
      %s65 = ssub.s32 64, 64
      %66 = vsyncadd [#allocation9], %s65
      %s68 = sshll.u32 [#allocation8], 4
      %s69 = int_to_ptr.vmem [resolvable:$true] %s68
      %71 = dma.vmem_to_hbm [thread:$0]  %s69, 64, %s3, [#allocation9]
    $region25: #{tpu_custom_call.1} parent=1 // pred_fallthru
      _
    // Predicated region
    $region26: #{tpu_custom_call.1} parent=1 // pred_check
      _
    $region27: #{tpu_custom_call.1} parent=1 // pred_check_branch
      %73 = sbr.rel (0) target = $region29
    $region28: #{tpu_custom_call.1} parent=1 // pred_region
      %74 = dma.done [#allocation4], 64
    $region29: #{tpu_custom_call.1} parent=1 // pred_fallthru
      _
    // Predicated region
    $region30: #{tpu_custom_call.1} parent=1 // pred_check
      _
    $region31: #{tpu_custom_call.1} parent=1 // pred_check_branch
      %76 = sbr.rel (0) target = $region33
    $region32: #{tpu_custom_call.1} parent=1 // pred_region
      %77 = dma.done [#allocation9], 64
    $region33: #{tpu_custom_call.1} parent=1 // pred_fallthru
      _
    %78 = vsyncpa [#allocation3], 1
    %79 = vsyncpa [#allocation6], 1
    %80 = vsyncpa [#allocation4], 1
    %81 = vsyncpa [#allocation9], 1

</llo_original>
